<compile_context>
chip_gen: v7x
topology: tpu7x:2x2x1
jax: 0.10.0
libtpu: 0.0.40
codegen_flags: <defaults>
</compile_context>

<pallas_src>
import jax
import jax.numpy as jnp
from jax.experimental import pallas as pl
from jax.experimental.pallas import tpu as pltpu

VMEM_BUDGET_BYTES = 48 * 1024 * 1024   # fits v7x (64 MiB physical); fine on v5e/v6e


def _round_up(x, m):
    return ((x + m - 1) // m) * m


# ---------------------------------------------------------------------------
# 1) Front-end kernel: attention over neighbors -> q = lhs * rel * e_c (bf16).
#    Whole (small) arrays live in VMEM; runs once per forward.
# ---------------------------------------------------------------------------
def _front_end_kernel(trp_ref, lhs_ref, rel_ref, nb_ref, wt_ref, b_ref, q_ref):
    nb = nb_ref[...]                                                   # (B, M, R)
    # w = W(cat([lhs, rel, rhs], dim=1)): one (B,3R)@(3R,R) MXU matmul + bias.
    w = jnp.dot(trp_ref[...], wt_ref[...],
                preferred_element_type=jnp.float32) + b_ref[...]       # (B, R)
    # scores = einsum('bk,bmk->bm', w, nb_E); padded rows score 0 and stay in the
    # softmax denominator (matches the PyTorch module; intentional).
    scores = jnp.sum(nb * w[:, None, :], axis=-1)                      # (B, M)
    smax = jnp.max(scores, axis=-1, keepdims=True)
    p = jnp.exp(scores - smax)
    alpha = p / jnp.sum(p, axis=-1, keepdims=True)                     # exact softmax
    e_c = jnp.sum(alpha[:, :, None] * nb, axis=1)                      # (B, R)
    q_ref[...] = (lhs_ref[...] * rel_ref[...] * e_c).astype(q_ref.dtype)


# ---------------------------------------------------------------------------
# 2) Streaming kernel: the memory-bound hot path.  One lane-dense (R, TN) tile
#    of rhs^T per grid step; q stays resident (same block index every step).
# ---------------------------------------------------------------------------
def _score_stream_kernel(q_ref, rhsT_ref, out_ref):
    out_ref[...] = jnp.dot(q_ref[...], rhsT_ref[...],
                           preferred_element_type=jnp.float32).astype(out_ref.dtype)


def _choose_tile_n(n_ent, rank, batch, rhs_bytes, out_bytes,
                   target_tile_bytes=2 * 1024 * 1024,
                   vmem_budget=VMEM_BUDGET_BYTES):
    """Lane-dense TN: ~1-4 MB of rhs^T per step, >=2 tiles when the vocab allows
    (v7x megacore), and double-buffered rhsT+out plus resident q within budget."""
    n128 = _round_up(n_ent, 128)
    tn = _round_up(max(512, target_tile_bytes // max(1, rhs_bytes * rank)), 128)
    if n128 >= 256:                               # ensure at least two tiles
        tn = min(tn, _round_up((n128 + 1) // 2, 128))
    tn = min(tn, n128)

    def vmem_needed(t):
        return (2 * rank * t * rhs_bytes          # double-buffered rhs^T tiles
                + 2 * batch * t * out_bytes       # double-buffered output tiles
                + batch * rank * rhs_bytes)       # resident q

    while tn > 128 and vmem_needed(tn) > vmem_budget:
        tn -= 128
    return max(tn, 128)


def precompute_params(rhs_w, W_weight, W_bias, *, batch_hint=8,
                      rhs_dtype=jnp.bfloat16, out_dtype=jnp.float32):
    """Done ONCE at parameter-load time (never per forward call).
    TODO(synk): for another ~2x HBM-byte cut, quantize rhsT to int8 (v5e/v6e) or
    fp8-e4m3 (v7x) here and rescale the (B, TN) result inside the kernel."""
    n_ent, rank = rhs_w.shape
    rhs_bytes = jnp.dtype(rhs_dtype).itemsize
    out_bytes = jnp.dtype(out_dtype).itemsize
    tn = _choose_tile_n(n_ent, rank, batch_hint, rhs_bytes, out_bytes)
    n_pad = _round_up(n_ent, tn)
    rhsT = rhs_w.T.astype(rhs_dtype)              # (R, N_ent) streamed operand
    if n_pad != n_ent:                            # pad: every tile full & lane-dense
        rhsT = jnp.pad(rhsT, ((0, 0), (0, n_pad - n_ent)))
    return {
        "Wt": W_weight.T,                         # (3R, R): trp_E @ Wt == trp_E @ W.T
        "bias": W_bias[None, :],                  # (1, R)
        "rhsT": rhsT,                             # (R, n_pad) bf16
        "tn": tn, "n_ent": n_ent, "n_pad": n_pad, "out_dtype": out_dtype,
    }


def context_cp_forward(x_idx, nb_E, lhs_w, rel_w, rhs_w, params):
    """Pallas forward. x_idx: (B,3) int32. Returns (tot_forward, (lhs, rel, rhs))."""
    B = x_idx.shape[0]
    R = lhs_w.shape[1]
    rhsT, TN = params["rhsT"], params["tn"]
    n_ent, n_pad, out_dtype = params["n_ent"], params["n_pad"], params["out_dtype"]
    n_tiles = n_pad // TN

    # Glue: embedding gathers + concat (tiny, plain JAX).
    lhs = lhs_w[x_idx[:, 0]]                      # (B, R)
    rel = rel_w[x_idx[:, 1]]                      # (B, R)
    rhs = rhs_w[x_idx[:, 2]]                      # (B, R)
    trp_E = jnp.concatenate([lhs, rel, rhs], axis=1)   # (B, 3R)

    # 1) Attention front-end: one small pallas_call, whole arrays in VMEM.
    q = pl.pallas_call(
        _front_end_kernel,
        out_shape=jax.ShapeDtypeStruct((B, R), rhsT.dtype),
    )(trp_E, lhs, rel, nb_E, params["Wt"], params["bias"])

    # 2) Streaming scorer: q @ rhs^T tiled over the (padded) entity axis.
    scores = pl.pallas_call(
        _score_stream_kernel,
        out_shape=jax.ShapeDtypeStruct((B, n_pad), out_dtype),
        grid=(n_tiles,),
        in_specs=[
            pl.BlockSpec((B, R), lambda j: (0, 0)),     # resident q (bf16)
            pl.BlockSpec((R, TN), lambda j: (0, j)),    # streamed rhs^T tile
        ],
        out_specs=pl.BlockSpec((B, TN), lambda j: (0, j)),
        compiler_params=pltpu.CompilerParams(
            dimension_semantics=("parallel",),          # v7x: tiles split over 2 TCs
            vmem_limit_bytes=VMEM_BUDGET_BYTES,
        ),
    )(q, rhsT)

    tot_forward = scores[:, :n_ent]                     # drop padded columns
    return tot_forward, (lhs, rel, rhs)


def context_cp_forward_ref(x_idx, nb_E, lhs_w, rel_w, rhs_w, W_weight, W_bias,
                           rhs_dtype=jnp.bfloat16):
    """Pure-JAX reference of the PyTorch forward (same bf16 streaming cast)."""
    lhs = lhs_w[x_idx[:, 0]]
    rel = rel_w[x_idx[:, 1]]
    rhs = rhs_w[x_idx[:, 2]]
    trp_E = jnp.concatenate([lhs, rel, rhs], axis=1)
    w = trp_E @ W_weight.T + W_bias
    scores = jnp.einsum('bk,bmk->bm', w, nb_E)
    alpha = jax.nn.softmax(scores, axis=1)
    e_c = jnp.einsum('bm,bmk->bk', alpha, nb_E)
    q = (lhs * rel * e_c).astype(rhs_dtype)
    tot_forward = jnp.dot(q, rhs_w.T.astype(rhs_dtype),
                          preferred_element_type=jnp.float32)
    return tot_forward, (lhs, rel, rhs)


if __name__ == "__main__":
    # Small, deterministic problem consistent with the module:
    #   sizes = (N_lhs, N_rel, N_rhs), rank R, max_NB neighbors M, batch B.
    # N_rhs deliberately NOT a multiple of 128 to exercise the pad-and-slice path
    # (still 2 lane-dense tiles after padding -> pipelined, unmasked stores).
    B, R, M = 8, 32, 16
    N_lhs, N_rel, N_rhs = 64, 16, 1000
    init_size = 0.001

    key = jax.random.PRNGKey(0)
    k_lhs, k_rel, k_rhs, k_W, k_b, k_x, k_nb, k_len = jax.random.split(key, 8)

    # nn.Embedding default init ~ N(0,1), scaled by init_size.
    lhs_w = jax.random.normal(k_lhs, (N_lhs, R), jnp.float32) * init_size
    rel_w = jax.random.normal(k_rel, (N_rel, R), jnp.float32) * init_size
    rhs_w = jax.random.normal(k_rhs, (N_rhs, R), jnp.float32) * init_size

    # nn.Linear(3R -> R): uniform(-1/sqrt(3R), 1/sqrt(3R)).
    bound = 1.0 / jnp.sqrt(3.0 * R)
    W_weight = jax.random.uniform(k_W, (R, 3 * R), jnp.float32, -bound, bound)
    W_bias = jax.random.uniform(k_b, (R,), jnp.float32, -bound, bound)

    # Input triples x: (B, 3) integer ids.
    x_idx = jnp.stack([
        jax.random.randint(jax.random.fold_in(k_x, 0), (B,), 0, N_lhs),
        jax.random.randint(jax.random.fold_in(k_x, 1), (B,), 0, N_rel),
        jax.random.randint(jax.random.fold_in(k_x, 2), (B,), 0, N_rhs),
    ], axis=1).astype(jnp.int32)

    # Synthetic get_neighbor(): random neighbor ids + per-subject lengths,
    # zero-padded rows of rhs embeddings (stands in for sorted_data/slice_dic).
    nb_idx = jax.random.randint(k_nb, (B, M), 0, N_rhs)
    lengths = jax.random.randint(k_len, (B,), 0, M + 1)
    mask = (jnp.arange(M)[None, :] < lengths[:, None])[..., None]   # (B, M, 1)
    nb_E = jnp.where(mask, rhs_w[nb_idx], 0.0).astype(jnp.float32)  # (B, M, R)

    # Parameters precomputed once (transpose + bf16 cast + padding NOT per forward).
    params = precompute_params(rhs_w, W_weight, W_bias, batch_hint=B)

    out, (lhs, rel, rhs) = context_cp_forward(
        x_idx, nb_E, lhs_w, rel_w, rhs_w, params)
    jax.block_until_ready(out)

    out_ref, _ = context_cp_forward_ref(
        x_idx, nb_E, lhs_w, rel_w, rhs_w, W_weight, W_bias)

    assert out.shape == (B, N_rhs)
    # Scale-aware check (bf16-streamed operand in both paths).
    rel_err = jnp.max(jnp.abs(out - out_ref)) / (jnp.max(jnp.abs(out_ref)) + 1e-30)
    assert rel_err < 1e-2, f"mismatch vs reference, rel_err={rel_err}"

    print("KERNEL_OK")
</pallas_src>

<mosaic_0001>
module attributes {stable_mosaic.version = 11 : i64} {
  func.func @_front_end_kernel(%arg0: memref<8x96xf32, #tpu.memory_space<vmem>>, %arg1: memref<8x32xf32, #tpu.memory_space<vmem>>, %arg2: memref<8x32xf32, #tpu.memory_space<vmem>>, %arg3: memref<8x16x32xf32, #tpu.memory_space<vmem>>, %arg4: memref<96x32xf32, #tpu.memory_space<vmem>>, %arg5: memref<1x32xf32, #tpu.memory_space<vmem>>, %arg6: memref<8x32xbf16, #tpu.memory_space<vmem>>) attributes {dimension_semantics = [], scalar_prefetch = 0 : i64, scratch_operands = 0 : i64, tpu.core_type = #tpu.core_type<tc>} {
    %c0 = arith.constant 0 : index
    %c0_0 = arith.constant 0 : index
    %c0_1 = arith.constant 0 : index
    %0 = vector.load %arg3[%c0, %c0_0, %c0_1] : memref<8x16x32xf32, #tpu.memory_space<vmem>>, vector<8x16x32xf32>
    %c0_2 = arith.constant 0 : index
    %c0_3 = arith.constant 0 : index
    %1 = vector.load %arg0[%c0_2, %c0_3] : memref<8x96xf32, #tpu.memory_space<vmem>>, vector<8x96xf32>
    %c0_4 = arith.constant 0 : index
    %c0_5 = arith.constant 0 : index
    %2 = vector.load %arg4[%c0_4, %c0_5] : memref<96x32xf32, #tpu.memory_space<vmem>>, vector<96x32xf32>
    %cst = arith.constant dense<0.000000e+00> : vector<8x32xf32>
    %3 = tpu.matmul %1, %2, %cst {dimension_numbers = #tpu.dot_dimension_numbers<[1], [0], [0], [1], [0, 0, 1, 1], [], []>} : vector<8x96xf32>, vector<96x32xf32>, vector<8x32xf32> -> vector<8x32xf32>
    %c0_6 = arith.constant 0 : index
    %c0_7 = arith.constant 0 : index
    %4 = vector.load %arg5[%c0_6, %c0_7] : memref<1x32xf32, #tpu.memory_space<vmem>>, vector<1x32xf32>
    %5 = vector.broadcast %4 : vector<1x32xf32> to vector<8x32xf32>
    %6 = arith.addf %3, %5 : vector<8x32xf32>
    %7 = vector.shape_cast %6 : vector<8x32xf32> to vector<8x1x32xf32>
    %8 = vector.broadcast %7 : vector<8x1x32xf32> to vector<8x16x32xf32>
    %9 = arith.mulf %0, %8 : vector<8x16x32xf32>
    %cst_8 = arith.constant dense<0.000000e+00> : vector<8x16xf32>
    %10 = vector.multi_reduction <add>, %9, %cst_8 [2] : vector<8x16x32xf32> to vector<8x16xf32>
    %cst_9 = arith.constant dense<0xFF800000> : vector<8xf32>
    %11 = vector.multi_reduction <maximumf>, %10, %cst_9 [1] : vector<8x16xf32> to vector<8xf32>
    %12 = vector.shape_cast %11 : vector<8xf32> to vector<8x1xf32>
    %13 = vector.broadcast %12 : vector<8x1xf32> to vector<8x16xf32>
    %14 = arith.subf %10, %13 : vector<8x16xf32>
    %15 = math.exp %14 : vector<8x16xf32>
    %cst_10 = arith.constant dense<0.000000e+00> : vector<8xf32>
    %16 = vector.multi_reduction <add>, %15, %cst_10 [1] : vector<8x16xf32> to vector<8xf32>
    %17 = vector.shape_cast %16 : vector<8xf32> to vector<8x1xf32>
    %18 = vector.broadcast %17 : vector<8x1xf32> to vector<8x16xf32>
    %19 = arith.divf %15, %18 : vector<8x16xf32>
    %20 = vector.shape_cast %19 : vector<8x16xf32> to vector<8x16x1xf32>
    %21 = vector.broadcast %20 : vector<8x16x1xf32> to vector<8x16x32xf32>
    %22 = arith.mulf %21, %0 : vector<8x16x32xf32>
    %cst_11 = arith.constant dense<0.000000e+00> : vector<8x32xf32>
    %23 = vector.multi_reduction <add>, %22, %cst_11 [1] : vector<8x16x32xf32> to vector<8x32xf32>
    %c0_12 = arith.constant 0 : index
    %c0_13 = arith.constant 0 : index
    %24 = vector.load %arg1[%c0_12, %c0_13] : memref<8x32xf32, #tpu.memory_space<vmem>>, vector<8x32xf32>
    %c0_14 = arith.constant 0 : index
    %c0_15 = arith.constant 0 : index
    %25 = vector.load %arg2[%c0_14, %c0_15] : memref<8x32xf32, #tpu.memory_space<vmem>>, vector<8x32xf32>
    %26 = arith.mulf %24, %25 : vector<8x32xf32>
    %27 = arith.mulf %26, %23 : vector<8x32xf32>
    %28 = arith.truncf %27 : vector<8x32xf32> to vector<8x32xbf16>
    %c0_16 = arith.constant 0 : index
    %c0_17 = arith.constant 0 : index
    %29 = vector.load %arg6[%c0_16, %c0_17] : memref<8x32xbf16, #tpu.memory_space<vmem>>, vector<8x32xbf16>
    tpu.vector_store %arg6[%c0_16, %c0_17], %28 {strides = array<i32>} : memref<8x32xbf16, #tpu.memory_space<vmem>>, vector<8x32xbf16>,
    return
  }
}

</mosaic_0001>

<llo_original>
// kernel: tpu_custom_call.1
$region0: #{tpu_custom_call.1}
  #allocation0 [shape = 'u32[]', space=smem, size = 0x4, offset = 0x4, fixed_abs, tag = 'smem constant byte address 0x4 - core index']
  #allocation1 [shape = 'u32[144,128]{1,0:T(1,128)}', space=vmem, size = 0x12000, scoped, tag = 'internal scratch']
  %s0 = inlined_call_operand.vmem [shape: f32[8,96], index: 0, kind: input, shape index: {}]
  %s1 = inlined_call_operand.hbm [shape: f32[8,32], index: 1, kind: input, shape index: {}]
  %s2 = inlined_call_operand.hbm [shape: f32[8,32], index: 2, kind: input, shape index: {}]
  %s3 = inlined_call_operand.vmem [shape: f32[8,16,32], index: 3, kind: input, shape index: {}]
  %s4 = inlined_call_operand.vmem [shape: f32[96,32], index: 4, kind: input, shape index: {}]
  %s5 = inlined_call_operand.vmem [shape: f32[1,32], index: 5, kind: input, shape index: {}]
  %s6 = inlined_call_operand.hbm [shape: bf16[8,32], index: 6, kind: output, shape index: {}]
  %s7 = sld [smem:[#allocation0]]
  $region42: #{tpu_custom_call.1} parent=0
    _
  %s9 = ssub.s32 1, %s7
  %s10 = scalar_select 0, %s9, %s7
  $region1: #{tpu_custom_call.1} parent=0
    #allocation2 [shape = 'u8[4096]{0}', space=vmem, size = 0x1000, scoped, tag = 'input window, operand 1, single buffered']
    #allocation3 [shape = 's32[1]{0}', space=sflag, size = 0x4, scoped, tag = 'scoped memory for tpu_custom_call.1']
    #allocation4 [shape = 's32[1]{0}', space=sflag, size = 0x4, scoped, tag = 'scoped memory for tpu_custom_call.1']
    #allocation5 [shape = 'u8[4096]{0}', space=vmem, size = 0x1000, scoped, tag = 'input window, operand 2, single buffered']
    #allocation6 [shape = 's32[1]{0}', space=sflag, size = 0x4, scoped, tag = 'scoped memory for tpu_custom_call.1']
    #allocation7 [shape = 'u8[2048]{0}', space=vmem, size = 0x800, scoped, tag = 'output window, operand 0, single buffered']
    %11 = vsyncpa [#allocation3], 0
    %12 = vsyncpa [#allocation6], 0
    %13 = vsyncpa [#allocation4], 0
    // Predicated region
    $region2: #{tpu_custom_call.1} parent=1 // pred_check
      _
    $region3: #{tpu_custom_call.1} parent=1 // pred_check_branch
      %15 = sbr.rel (0) target = $region5
    $region4: #{tpu_custom_call.1} parent=1 // pred_region
      _
    $region5: #{tpu_custom_call.1} parent=1 // pred_fallthru
      _
    // Predicated region
    $region6: #{tpu_custom_call.1} parent=1 // pred_check
      _
    $region7: #{tpu_custom_call.1} parent=1 // pred_check_branch
      %17 = sbr.rel (0) target = $region9
    $region8: #{tpu_custom_call.1} parent=1 // pred_region
      %s19 = ssub.s32 128, 128
      %20 = vsyncadd [#allocation3], %s19
      %s22 = sshll.u32 [#allocation2], 4
      %s23 = int_to_ptr.vmem [resolvable:$true] %s22
      %25 = dma.hbm_to_vmem [thread:$0]  %s1, 128, %s23, [#allocation3]
    $region9: #{tpu_custom_call.1} parent=1 // pred_fallthru
      _
    // Predicated region
    $region10: #{tpu_custom_call.1} parent=1 // pred_check
      _
    $region11: #{tpu_custom_call.1} parent=1 // pred_check_branch
      %27 = sbr.rel (0) target = $region13
    $region12: #{tpu_custom_call.1} parent=1 // pred_region
      %s29 = ssub.s32 128, 128
      %30 = vsyncadd [#allocation6], %s29
      %s32 = sshll.u32 [#allocation5], 4
      %s33 = int_to_ptr.vmem [resolvable:$true] %s32
      %35 = dma.hbm_to_vmem [thread:$0]  %s2, 128, %s33, [#allocation6]
    $region13: #{tpu_custom_call.1} parent=1 // pred_fallthru
      _
    // Predicated region
    $region14: #{tpu_custom_call.1} parent=1 // pred_check
      _
    $region15: #{tpu_custom_call.1} parent=1 // pred_check_branch
      %37 = sbr.rel (0) target = $region17
    $region16: #{tpu_custom_call.1} parent=1 // pred_region
      _
    $region17: #{tpu_custom_call.1} parent=1 // pred_fallthru
      _
    // Predicated region
    $region18: #{tpu_custom_call.1} parent=1 // pred_check
      _
    $region19: #{tpu_custom_call.1} parent=1 // pred_check_branch
      %39 = sbr.rel (0) target = $region21
    $region20: #{tpu_custom_call.1} parent=1 // pred_region
      _
    $region21: #{tpu_custom_call.1} parent=1 // pred_fallthru
      _
    // Predicated region
    $region22: #{tpu_custom_call.1} parent=1 // pred_check
      _
    $region23: #{tpu_custom_call.1} parent=1 // pred_check_branch
      %41 = sbr.rel (0) target = $region25
    $region24: #{tpu_custom_call.1} parent=1 // pred_region
      _
    $region25: #{tpu_custom_call.1} parent=1 // pred_fallthru
      _
    // Predicated region
    $region26: #{tpu_custom_call.1} parent=1 // pred_check
      _
    $region27: #{tpu_custom_call.1} parent=1 // pred_check_branch
      %43 = sbr.rel (0) target = $region29
    $region28: #{tpu_custom_call.1} parent=1 // pred_region
      %44 = dma.done [#allocation3], 128
    $region29: #{tpu_custom_call.1} parent=1 // pred_fallthru
      _
    // Predicated region
    $region30: #{tpu_custom_call.1} parent=1 // pred_check
      _
    $region31: #{tpu_custom_call.1} parent=1 // pred_check_branch
      %46 = sbr.rel (0) target = $region33
    $region32: #{tpu_custom_call.1} parent=1 // pred_region
      %47 = dma.done [#allocation6], 128
    $region33: #{tpu_custom_call.1} parent=1 // pred_fallthru
      _
    %v48 = vld [vmem:[%s3] sm:$0xff]
    %v49 = vld [vmem:[%s3 + $0x8] sm:$0xff]
    %v50 = vld [vmem:[%s3 + $0x10] sm:$0xff]
    %v51 = vld [vmem:[%s3 + $0x18] sm:$0xff]
    %v52 = vld [vmem:[%s3 + $0x20] sm:$0xff]
    %v53 = vld [vmem:[%s3 + $0x28] sm:$0xff]
    %v54 = vld [vmem:[%s3 + $0x30] sm:$0xff]
    %v55 = vld [vmem:[%s3 + $0x38] sm:$0xff]
    %v56 = vld [vmem:[%s3 + $0x40] sm:$0xff]
    %v57 = vld [vmem:[%s3 + $0x48] sm:$0xff]
    %v58 = vld [vmem:[%s3 + $0x50] sm:$0xff]
    %v59 = vld [vmem:[%s3 + $0x58] sm:$0xff]
    %v60 = vld [vmem:[%s3 + $0x60] sm:$0xff]
    %v61 = vld [vmem:[%s3 + $0x68] sm:$0xff]
    %v62 = vld [vmem:[%s3 + $0x70] sm:$0xff]
    %v63 = vld [vmem:[%s3 + $0x78] sm:$0xff]
    %v64 = vld [vmem:[%s0] sm:$0xff]
    %v65 = vld [vmem:[%s4] sm:$0xff]
    %v66 = vld [vmem:[%s4 + $0x8] sm:$0xff]
    %v67 = vld [vmem:[%s4 + $0x10] sm:$0xff]
    %v68 = vld [vmem:[%s4 + $0x18] sm:$0xff]
    %v69 = vld [vmem:[%s4 + $0x20] sm:$0xff]
    %v70 = vld [vmem:[%s4 + $0x28] sm:$0xff]
    %v71 = vld [vmem:[%s4 + $0x30] sm:$0xff]
    %v72 = vld [vmem:[%s4 + $0x38] sm:$0xff]
    %v73 = vld [vmem:[%s4 + $0x40] sm:$0xff]
    %v74 = vld [vmem:[%s4 + $0x48] sm:$0xff]
    %v75 = vld [vmem:[%s4 + $0x50] sm:$0xff]
    %v76 = vld [vmem:[%s4 + $0x58] sm:$0xff]
    %v77 = vld [vmem:[%s5] sm:$0x1]
    %v79 = vlaneseq
    %v80 = vshrl.u32 %v79, 7
    %v81 = vsub.s32 0, %v80
    %v82 = vrot.slane %v77, %v81
    %vm84 = vcmask 785408
    %v86 = vsel %vm84, %v64, 0
    %88 = vmatprep.subr.mxu0 0.0
    %89 = vmatpush1.msra.mxu0 %v65
    %90 = vmatprep.subr.mxu0 0.0
    %91 = vmatpush1.msra.mxu0 %v66
    %92 = vmatprep.subr.mxu0 0.0
    %93 = vmatpush1.msra.mxu0 %v67
    %94 = vmatprep.subr.mxu0 0.0
    %95 = vmatpush1.msra.mxu0 %v68
    %96 = vmatprep.subr.mxu0 0.0
    %97 = vmatpush1.msra.mxu0 %v69
    %98 = vmatprep.subr.mxu0 0.0
    %99 = vmatpush1.msra.mxu0 %v70
    %100 = vmatprep.subr.mxu0 0.0
    %101 = vmatpush1.msra.mxu0 %v71
    %102 = vmatprep.subr.mxu0 0.0
    %103 = vmatpush1.msra.mxu0 %v72
    %104 = vmatprep.subr.mxu0 0.0
    %105 = vmatpush1.msra.mxu0 %v73
    %106 = vmatprep.subr.mxu0 0.0
    %107 = vmatpush1.msra.mxu0 %v74
    %108 = vmatprep.subr.mxu0 0.0
    %109 = vmatpush1.msra.mxu0 %v75
    %110 = vmatprep.subr.mxu0 0.0
    %111 = vmatpush1.msra.mxu0 %v76
    %112 = vmatprep.subr.mxu0 0.0
    %113 = vmatpush1.msra.mxu0 0.0
    %114 = vmatprep.subr.mxu0 0.0
    %115 = vmatpush1.msra.mxu0 0.0
    %116 = vmatprep.subr.mxu0 0.0
    %117 = vmatpush1.msra.mxu0 0.0
    %118 = vmatprep.subr.mxu0 0.0
    %119 = vmatpush1.msra.mxu0 0.0
    %120 = vmatprep.subr.mxu0 0.0
    %121 = vmatpush1.msra.mxu0 0.0
    %122 = vmatprep.subr.mxu0 0.0
    %123 = vmatpush1.msra.mxu0 0.0
    %124 = vmatprep.subr.mxu0 0.0
    %125 = vmatpush1.msra.mxu0 0.0
    %126 = vmatprep.subr.mxu0 0.0
    %127 = vmatpush1.msra.mxu0 0.0
    %128 = vmatprep.subr.mxu0 0.0
    %129 = vmatpush1.msra.mxu0 0.0
    %130 = vmatprep.subr.mxu0 0.0
    %131 = vmatpush1.msra.mxu0 0.0
    %132 = vmatprep.subr.mxu0 0.0
    %133 = vmatpush1.msra.mxu0 0.0
    %134 = vmatprep.subr.mxu0 0.0
    %135 = vmatpush1.msra.mxu0 0.0
    %136 = vmatprep.subr.mxu0 0.0
    %137 = vmatpush1.msra.mxu0 0.0
    %138 = vmatprep.subr.mxu0 0.0
    %139 = vmatpush1.msra.mxu0 0.0
    %140 = vmatprep.subr.mxu0 0.0
    %141 = vmatpush1.msra.mxu0 0.0
    %142 = vmatprep.subr.mxu0 0.0
    %143 = vmatpush1.msra.mxu0 0.0
    %144 = vmatprep.subr.mxu0 0.0
    %145 = vmatpush1.msra.mxu0 0.0
    %146 = vmatprep.subr.mxu0 0.0
    %147 = vmatpush1.msra.mxu0 0.0
    %148 = vmatprep.subr.mxu0 0.0
    %149 = vmatpush1.msra.mxu0 0.0
    %150 = vmatprep.subr.mxu0 0.0
    %151 = vmatpush1.msra.mxu0 0.0
    %152 = vmatprep.mubr.f32.mxu0 0.0
    %153 = vmatmul.mubr.f32.gmra.mrb[0].mxu0 %v86
    %v154 = vpop.f32.mrb[0].mxu0
    %v155 = vadd.f32 %v82, %v154
    %v156 = vpop.f32.mrb[0].mxu0
    %157 = vdwg.mxu0
    %v159 = vcombine.high %v155, %v155
    %v161 = vunpack.c.l.s4 1966171168
    %v162 = vunpack.c.0.s8 %v161
    %v163 = vlaneseq
    %v164 = vshrl.u32 %v163, 7
    %v165 = vsub.s32 %v162, %v164
    %v166 = vrot.slane %v155, %v165
    %v168 = vunpack.c.l.s4 1966171168
    %v169 = vunpack.c.0.s8 %v168
    %v170 = vlaneseq
    %v171 = vshrl.u32 %v170, 7
    %v172 = vsub.s32 %v169, %v171
    %v173 = vrot.slane %v159, %v172
    %v174 = vcombine.high %v166, %v166
    %v175 = vcombine.high %v173, %v173
    %v177 = vunpack.c.l.s4 1966171168
    %v178 = vunpack.c.0.s8 %v177
    %v179 = vlaneseq
    %v180 = vshrl.u32 %v179, 7
    %v181 = vsub.s32 %v178, %v180
    %v182 = vrot.slane %v166, %v181
    %v184 = vunpack.c.l.s4 1966171168
    %v185 = vunpack.c.0.s8 %v184
    %v186 = vlaneseq
    %v187 = vshrl.u32 %v186, 7
    %v188 = vsub.s32 %v185, %v187
    %v189 = vrot.slane %v173, %v188
    %v191 = vunpack.c.l.s4 1966171168
    %v192 = vunpack.c.0.s8 %v191
    %v193 = vlaneseq
    %v194 = vshrl.u32 %v193, 7
    %v195 = vsub.s32 %v192, %v194
    %v196 = vrot.slane %v174, %v195
    %v198 = vunpack.c.l.s4 1966171168
    %v199 = vunpack.c.0.s8 %v198
    %v200 = vlaneseq
    %v201 = vshrl.u32 %v200, 7
    %v202 = vsub.s32 %v199, %v201
    %v203 = vrot.slane %v175, %v202
    %v204 = vcombine.high %v182, %v182
    %v205 = vcombine.high %v189, %v189
    %v206 = vcombine.high %v196, %v196
    %v207 = vcombine.high %v203, %v203
    %v208 = vlaneseq
    %v209 = vshrl.u32 %v208, 7
    %v210 = vsub.s32 0, %v209
    %v211 = vrot.slane %v182, %v210
    %v212 = vlaneseq
    %v213 = vshrl.u32 %v212, 7
    %v214 = vsub.s32 0, %v213
    %v215 = vrot.slane %v196, %v214
    %v216 = vlaneseq
    %v217 = vshrl.u32 %v216, 7
    %v218 = vsub.s32 0, %v217
    %v219 = vrot.slane %v204, %v218
    %v220 = vlaneseq
    %v221 = vshrl.u32 %v220, 7
    %v222 = vsub.s32 0, %v221
    %v223 = vrot.slane %v206, %v222
    %v224 = vlaneseq
    %v225 = vshrl.u32 %v224, 7
    %v226 = vsub.s32 0, %v225
    %v227 = vrot.slane %v189, %v226
    %v228 = vlaneseq
    %v229 = vshrl.u32 %v228, 7
    %v230 = vsub.s32 0, %v229
    %v231 = vrot.slane %v203, %v230
    %v232 = vlaneseq
    %v233 = vshrl.u32 %v232, 7
    %v234 = vsub.s32 0, %v233
    %v235 = vrot.slane %v205, %v234
    %v236 = vlaneseq
    %v237 = vshrl.u32 %v236, 7
    %v238 = vsub.s32 0, %v237
    %v239 = vrot.slane %v207, %v238
    %v248 = vmul.f32 %v48, %v211
    %v249 = vmul.f32 %v49, %v211
    %v250 = vmul.f32 %v50, %v215
    %v251 = vmul.f32 %v51, %v215
    %v252 = vmul.f32 %v52, %v219
    %v253 = vmul.f32 %v53, %v219
    %v254 = vmul.f32 %v54, %v223
    %v255 = vmul.f32 %v55, %v223
    %v256 = vmul.f32 %v56, %v227
    %v257 = vmul.f32 %v57, %v227
    %v258 = vmul.f32 %v58, %v231
    %v259 = vmul.f32 %v59, %v231
    %v260 = vmul.f32 %v60, %v235
    %v261 = vmul.f32 %v61, %v235
    %v262 = vmul.f32 %v62, %v239
    %v263 = vmul.f32 %v63, %v239
    %vm264 = vcmask 261120
    %v265 = vsel %vm264, %v248, 0.0
    %266 = vadd.xlane.f32.xlu0 %v265
    %v267 = vpop.xlane.xlu0 %266
    %v268 = vsel %vm264, %v249, 0.0
    %269 = vadd.xlane.f32.xlu0 %v268
    %v270 = vpop.xlane.xlu0 %269
    %v271 = vsel %vm264, %v250, 0.0
    %272 = vadd.xlane.f32.xlu0 %v271
    %v273 = vpop.xlane.xlu0 %272
    %v274 = vsel %vm264, %v251, 0.0
    %275 = vadd.xlane.f32.xlu0 %v274
    %v276 = vpop.xlane.xlu0 %275
    %v277 = vsel %vm264, %v252, 0.0
    %278 = vadd.xlane.f32.xlu0 %v277
    %v279 = vpop.xlane.xlu0 %278
    %v280 = vsel %vm264, %v253, 0.0
    %281 = vadd.xlane.f32.xlu0 %v280
    %v282 = vpop.xlane.xlu0 %281
    %v283 = vsel %vm264, %v254, 0.0
    %284 = vadd.xlane.f32.xlu0 %v283
    %v285 = vpop.xlane.xlu0 %284
    %v286 = vsel %vm264, %v255, 0.0
    %287 = vadd.xlane.f32.xlu0 %v286
    %v288 = vpop.xlane.xlu0 %287
    %v289 = vsel %vm264, %v256, 0.0
    %290 = vadd.xlane.f32.xlu0 %v289
    %v291 = vpop.xlane.xlu0 %290
    %v292 = vsel %vm264, %v257, 0.0
    %293 = vadd.xlane.f32.xlu0 %v292
    %v294 = vpop.xlane.xlu0 %293
    %v295 = vsel %vm264, %v258, 0.0
    %296 = vadd.xlane.f32.xlu0 %v295
    %v297 = vpop.xlane.xlu0 %296
    %v298 = vsel %vm264, %v259, 0.0
    %299 = vadd.xlane.f32.xlu0 %v298
    %v300 = vpop.xlane.xlu0 %299
    %v301 = vsel %vm264, %v260, 0.0
    %302 = vadd.xlane.f32.xlu0 %v301
    %v303 = vpop.xlane.xlu0 %302
    %v304 = vsel %vm264, %v261, 0.0
    %305 = vadd.xlane.f32.xlu0 %v304
    %v306 = vpop.xlane.xlu0 %305
    %v307 = vsel %vm264, %v262, 0.0
    %308 = vadd.xlane.f32.xlu0 %v307
    %v309 = vpop.xlane.xlu0 %308
    %v310 = vsel %vm264, %v263, 0.0
    %311 = vadd.xlane.f32.xlu0 %v310
    %v312 = vpop.xlane.xlu0 %311
    %v329 = vlaneseq
    %v330 = vand.u32 %v329, 127
    %v331 = vlaneseq
    %v332 = vshrl.u32 %v331, 7
    %v333 = vsub.s32 %v330, %v332
    %v334 = vrot.slane %v267, %v333
    %v335 = vadd.s32 %v330, 4294967288
    %v336 = vlaneseq
    %v337 = vshrl.u32 %v336, 7
    %v338 = vsub.s32 %v335, %v337
    %v339 = vrot.slane %v270, %v338
    %vm340 = vcmask 130112
    %v341 = vsel %vm340, %v339, %v334
    %v342 = vlaneseq
    %v343 = vshrl.u32 %v342, 7
    %v344 = vsub.s32 %v330, %v343
    %v345 = vrot.slane %v273, %v344
    %v346 = vlaneseq
    %v347 = vshrl.u32 %v346, 7
    %v348 = vsub.s32 %v335, %v347
    %v349 = vrot.slane %v276, %v348
    %v350 = vsel %vm340, %v349, %v345
    %v351 = vlaneseq
    %v352 = vshrl.u32 %v351, 7
    %v353 = vsub.s32 %v330, %v352
    %v354 = vrot.slane %v279, %v353
    %v355 = vlaneseq
    %v356 = vshrl.u32 %v355, 7
    %v357 = vsub.s32 %v335, %v356
    %v358 = vrot.slane %v282, %v357
    %v359 = vsel %vm340, %v358, %v354
    %v360 = vlaneseq
    %v361 = vshrl.u32 %v360, 7
    %v362 = vsub.s32 %v330, %v361
    %v363 = vrot.slane %v285, %v362
    %v364 = vlaneseq
    %v365 = vshrl.u32 %v364, 7
    %v366 = vsub.s32 %v335, %v365
    %v367 = vrot.slane %v288, %v366
    %v368 = vsel %vm340, %v367, %v363
    %v369 = vlaneseq
    %v370 = vshrl.u32 %v369, 7
    %v371 = vsub.s32 %v330, %v370
    %v372 = vrot.slane %v291, %v371
    %v373 = vlaneseq
    %v374 = vshrl.u32 %v373, 7
    %v375 = vsub.s32 %v335, %v374
    %v376 = vrot.slane %v294, %v375
    %v377 = vsel %vm340, %v376, %v372
    %v378 = vlaneseq
    %v379 = vshrl.u32 %v378, 7
    %v380 = vsub.s32 %v330, %v379
    %v381 = vrot.slane %v297, %v380
    %v382 = vlaneseq
    %v383 = vshrl.u32 %v382, 7
    %v384 = vsub.s32 %v335, %v383
    %v385 = vrot.slane %v300, %v384
    %v386 = vsel %vm340, %v385, %v381
    %v387 = vlaneseq
    %v388 = vshrl.u32 %v387, 7
    %v389 = vsub.s32 %v330, %v388
    %v390 = vrot.slane %v303, %v389
    %v391 = vlaneseq
    %v392 = vshrl.u32 %v391, 7
    %v393 = vsub.s32 %v335, %v392
    %v394 = vrot.slane %v306, %v393
    %v395 = vsel %vm340, %v394, %v390
    %v396 = vlaneseq
    %v397 = vshrl.u32 %v396, 7
    %v398 = vsub.s32 %v330, %v397
    %v399 = vrot.slane %v309, %v398
    %v400 = vlaneseq
    %v401 = vshrl.u32 %v400, 7
    %v402 = vsub.s32 %v335, %v401
    %v403 = vrot.slane %v312, %v402
    %v404 = vsel %vm340, %v403, %v399
    %vm405 = vcmask 1041409
    %v406 = vsel %vm405, %v350, %v341
    %vm407 = vcmask 1042434
    %v408 = vsel %vm407, %v359, %v406
    %vm409 = vcmask 1043459
    %v410 = vsel %vm409, %v368, %v408
    %vm411 = vcmask 1044484
    %v412 = vsel %vm411, %v377, %v410
    %vm413 = vcmask 1045509
    %v414 = vsel %vm413, %v386, %v412
    %vm415 = vcmask 1046534
    %v416 = vsel %vm415, %v395, %v414
    %vm417 = vcmask 1047559
    %v418 = vsel %vm417, %v404, %v416
    %vm420 = vcmask 130048
    %v421 = vsel %vm420, %v418, -inf
    %422 = vmax.xlane.f32.xlu0 %v421
    %v423 = vpop.xlane.xlu0 %422
    %v425 = vlaneseq
    %v426 = vshrl.u32 %v425, 7
    %v427 = vsub.s32 0, %v426
    %v428 = vrot.slane %v423, %v427
    %v429 = vlaneseq
    %v430 = vshrl.u32 %v429, 7
    %v431 = vsub.s32 1, %v430
    %v432 = vrot.slane %v423, %v431
    %v433 = vlaneseq
    %v434 = vshrl.u32 %v433, 7
    %v435 = vsub.s32 2, %v434
    %v436 = vrot.slane %v423, %v435
    %v437 = vlaneseq
    %v438 = vshrl.u32 %v437, 7
    %v439 = vsub.s32 3, %v438
    %v440 = vrot.slane %v423, %v439
    %v441 = vlaneseq
    %v442 = vshrl.u32 %v441, 7
    %v443 = vsub.s32 4, %v442
    %v444 = vrot.slane %v423, %v443
    %v445 = vlaneseq
    %v446 = vshrl.u32 %v445, 7
    %v447 = vsub.s32 5, %v446
    %v448 = vrot.slane %v423, %v447
    %v449 = vlaneseq
    %v450 = vshrl.u32 %v449, 7
    %v451 = vsub.s32 6, %v450
    %v452 = vrot.slane %v423, %v451
    %v453 = vlaneseq
    %v454 = vshrl.u32 %v453, 7
    %v455 = vsub.s32 7, %v454
    %v456 = vrot.slane %v423, %v455
    %v465 = vsub.f32 %v267, %v428
    %v466 = vsub.f32 %v270, %v428
    %v467 = vsub.f32 %v273, %v432
    %v468 = vsub.f32 %v276, %v432
    %v469 = vsub.f32 %v279, %v436
    %v470 = vsub.f32 %v282, %v436
    %v471 = vsub.f32 %v285, %v440
    %v472 = vsub.f32 %v288, %v440
    %v473 = vsub.f32 %v291, %v444
    %v474 = vsub.f32 %v294, %v444
    %v475 = vsub.f32 %v297, %v448
    %v476 = vsub.f32 %v300, %v448
    %v477 = vsub.f32 %v303, %v452
    %v478 = vsub.f32 %v306, %v452
    %v479 = vsub.f32 %v309, %v456
    %v480 = vsub.f32 %v312, %v456
    %v481 = vmul.f32 %v465, 1.442695
    %v482 = vpow.pop %v481
    %v483 = vmul.f32 %v466, 1.442695
    %v484 = vpow.pop %v483
    %v485 = vmul.f32 %v467, 1.442695
    %v486 = vpow.pop %v485
    %v487 = vmul.f32 %v468, 1.442695
    %v488 = vpow.pop %v487
    %v489 = vmul.f32 %v469, 1.442695
    %v490 = vpow.pop %v489
    %v491 = vmul.f32 %v470, 1.442695
    %v492 = vpow.pop %v491
    %v493 = vmul.f32 %v471, 1.442695
    %v494 = vpow.pop %v493
    %v495 = vmul.f32 %v472, 1.442695
    %v496 = vpow.pop %v495
    %v497 = vmul.f32 %v473, 1.442695
    %v498 = vpow.pop %v497
    %v499 = vmul.f32 %v474, 1.442695
    %v500 = vpow.pop %v499
    %v501 = vmul.f32 %v475, 1.442695
    %v502 = vpow.pop %v501
    %v503 = vmul.f32 %v476, 1.442695
    %v504 = vpow.pop %v503
    %v505 = vmul.f32 %v477, 1.442695
    %v506 = vpow.pop %v505
    %v507 = vmul.f32 %v478, 1.442695
    %v508 = vpow.pop %v507
    %v509 = vmul.f32 %v479, 1.442695
    %v510 = vpow.pop %v509
    %v511 = vmul.f32 %v480, 1.442695
    %v512 = vpow.pop %v511
    %529 = vset.pattern.permute.xlu0 0
    %530 = vperm.xlu0 %529, %v482
    %v531 = vpop.permute.xlu0 %530
    %532 = vset.pattern.permute.xlu0 0
    %533 = vperm.xlu0 %532, %v484
    %v534 = vpop.permute.xlu0 %533
    %535 = vset.pattern.permute.xlu0 0
    %536 = vperm.xlu0 %535, %v486
    %v537 = vpop.permute.xlu0 %536
    %538 = vset.pattern.permute.xlu0 0
    %539 = vperm.xlu0 %538, %v488
    %v540 = vpop.permute.xlu0 %539
    %541 = vset.pattern.permute.xlu0 0
    %542 = vperm.xlu0 %541, %v490
    %v543 = vpop.permute.xlu0 %542
    %544 = vset.pattern.permute.xlu0 0
    %545 = vperm.xlu0 %544, %v492
    %v546 = vpop.permute.xlu0 %545
    %547 = vset.pattern.permute.xlu0 0
    %548 = vperm.xlu0 %547, %v494
    %v549 = vpop.permute.xlu0 %548
    %550 = vset.pattern.permute.xlu0 0
    %551 = vperm.xlu0 %550, %v496
    %v552 = vpop.permute.xlu0 %551
    %553 = vset.pattern.permute.xlu0 0
    %554 = vperm.xlu0 %553, %v498
    %v555 = vpop.permute.xlu0 %554
    %556 = vset.pattern.permute.xlu0 0
    %557 = vperm.xlu0 %556, %v500
    %v558 = vpop.permute.xlu0 %557
    %559 = vset.pattern.permute.xlu0 0
    %560 = vperm.xlu0 %559, %v502
    %v561 = vpop.permute.xlu0 %560
    %562 = vset.pattern.permute.xlu0 0
    %563 = vperm.xlu0 %562, %v504
    %v564 = vpop.permute.xlu0 %563
    %565 = vset.pattern.permute.xlu0 0
    %566 = vperm.xlu0 %565, %v506
    %v567 = vpop.permute.xlu0 %566
    %568 = vset.pattern.permute.xlu0 0
    %569 = vperm.xlu0 %568, %v508
    %v570 = vpop.permute.xlu0 %569
    %571 = vset.pattern.permute.xlu0 0
    %572 = vperm.xlu0 %571, %v510
    %v573 = vpop.permute.xlu0 %572
    %574 = vset.pattern.permute.xlu0 0
    %575 = vperm.xlu0 %574, %v512
    %v576 = vpop.permute.xlu0 %575
    %v577 = vlaneseq
    %v578 = vshrl.u32 %v577, 7
    %v579 = vsub.s32 %v330, %v578
    %v580 = vrot.slane %v531, %v579
    %v581 = vlaneseq
    %v582 = vshrl.u32 %v581, 7
    %v583 = vsub.s32 %v335, %v582
    %v584 = vrot.slane %v534, %v583
    %v585 = vsel %vm340, %v584, %v580
    %v586 = vlaneseq
    %v587 = vshrl.u32 %v586, 7
    %v588 = vsub.s32 %v330, %v587
    %v589 = vrot.slane %v537, %v588
    %v590 = vlaneseq
    %v591 = vshrl.u32 %v590, 7
    %v592 = vsub.s32 %v335, %v591
    %v593 = vrot.slane %v540, %v592
    %v594 = vsel %vm340, %v593, %v589
    %v595 = vlaneseq
    %v596 = vshrl.u32 %v595, 7
    %v597 = vsub.s32 %v330, %v596
    %v598 = vrot.slane %v543, %v597
    %v599 = vlaneseq
    %v600 = vshrl.u32 %v599, 7
    %v601 = vsub.s32 %v335, %v600
    %v602 = vrot.slane %v546, %v601
    %v603 = vsel %vm340, %v602, %v598
    %v604 = vlaneseq
    %v605 = vshrl.u32 %v604, 7
    %v606 = vsub.s32 %v330, %v605
    %v607 = vrot.slane %v549, %v606
    %v608 = vlaneseq
    %v609 = vshrl.u32 %v608, 7
    %v610 = vsub.s32 %v335, %v609
    %v611 = vrot.slane %v552, %v610
    %v612 = vsel %vm340, %v611, %v607
    %v613 = vlaneseq
    %v614 = vshrl.u32 %v613, 7
    %v615 = vsub.s32 %v330, %v614
    %v616 = vrot.slane %v555, %v615
    %v617 = vlaneseq
    %v618 = vshrl.u32 %v617, 7
    %v619 = vsub.s32 %v335, %v618
    %v620 = vrot.slane %v558, %v619
    %v621 = vsel %vm340, %v620, %v616
    %v622 = vlaneseq
    %v623 = vshrl.u32 %v622, 7
    %v624 = vsub.s32 %v330, %v623
    %v625 = vrot.slane %v561, %v624
    %v626 = vlaneseq
    %v627 = vshrl.u32 %v626, 7
    %v628 = vsub.s32 %v335, %v627
    %v629 = vrot.slane %v564, %v628
    %v630 = vsel %vm340, %v629, %v625
    %v631 = vlaneseq
    %v632 = vshrl.u32 %v631, 7
    %v633 = vsub.s32 %v330, %v632
    %v634 = vrot.slane %v567, %v633
    %v635 = vlaneseq
    %v636 = vshrl.u32 %v635, 7
    %v637 = vsub.s32 %v335, %v636
    %v638 = vrot.slane %v570, %v637
    %v639 = vsel %vm340, %v638, %v634
    %v640 = vlaneseq
    %v641 = vshrl.u32 %v640, 7
    %v642 = vsub.s32 %v330, %v641
    %v643 = vrot.slane %v573, %v642
    %v644 = vlaneseq
    %v645 = vshrl.u32 %v644, 7
    %v646 = vsub.s32 %v335, %v645
    %v647 = vrot.slane %v576, %v646
    %v648 = vsel %vm340, %v647, %v643
    %v649 = vsel %vm405, %v594, %v585
    %v650 = vsel %vm407, %v603, %v649
    %v651 = vsel %vm409, %v612, %v650
    %v652 = vsel %vm411, %v621, %v651
    %v653 = vsel %vm413, %v630, %v652
    %v654 = vsel %vm415, %v639, %v653
    %v655 = vsel %vm417, %v648, %v654
    %v657 = vsel %vm420, %v655, 0.0
    %658 = vadd.xlane.f32.xlu0 %v657
    %v659 = vpop.xlane.xlu0 %658
    %v661 = vlaneseq
    %v662 = vshrl.u32 %v661, 7
    %v663 = vsub.s32 0, %v662
    %v664 = vrot.slane %v659, %v663
    %v665 = vlaneseq
    %v666 = vshrl.u32 %v665, 7
    %v667 = vsub.s32 1, %v666
    %v668 = vrot.slane %v659, %v667
    %v669 = vlaneseq
    %v670 = vshrl.u32 %v669, 7
    %v671 = vsub.s32 2, %v670
    %v672 = vrot.slane %v659, %v671
    %v673 = vlaneseq
    %v674 = vshrl.u32 %v673, 7
    %v675 = vsub.s32 3, %v674
    %v676 = vrot.slane %v659, %v675
    %v677 = vlaneseq
    %v678 = vshrl.u32 %v677, 7
    %v679 = vsub.s32 4, %v678
    %v680 = vrot.slane %v659, %v679
    %v681 = vlaneseq
    %v682 = vshrl.u32 %v681, 7
    %v683 = vsub.s32 5, %v682
    %v684 = vrot.slane %v659, %v683
    %v685 = vlaneseq
    %v686 = vshrl.u32 %v685, 7
    %v687 = vsub.s32 6, %v686
    %v688 = vrot.slane %v659, %v687
    %v689 = vlaneseq
    %v690 = vshrl.u32 %v689, 7
    %v691 = vsub.s32 7, %v690
    %v692 = vrot.slane %v659, %v691
    %v701 = vrcp.pop %v664
    %v702 = vmul.f32 %v482, %v701
    %v703 = vmul.f32 %v484, %v701
    %v704 = vrcp.pop %v668
    %v705 = vmul.f32 %v486, %v704
    %v706 = vmul.f32 %v488, %v704
    %v707 = vrcp.pop %v672
    %v708 = vmul.f32 %v490, %v707
    %v709 = vmul.f32 %v492, %v707
    %v710 = vrcp.pop %v676
    %v711 = vmul.f32 %v494, %v710
    %v712 = vmul.f32 %v496, %v710
    %v713 = vrcp.pop %v680
    %v714 = vmul.f32 %v498, %v713
    %v715 = vmul.f32 %v500, %v713
    %v716 = vrcp.pop %v684
    %v717 = vmul.f32 %v502, %v716
    %v718 = vmul.f32 %v504, %v716
    %v719 = vrcp.pop %v688
    %v720 = vmul.f32 %v506, %v719
    %v721 = vmul.f32 %v508, %v719
    %v722 = vrcp.pop %v692
    %v723 = vmul.f32 %v510, %v722
    %v724 = vmul.f32 %v512, %v722
    %726 = vset.pattern.permute.xlu0 0
    %727 = vperm.xlu0 %726, %v702
    %v728 = vpop.permute.xlu0 %727
    %731 = vset.pattern.permute.xlu0 0
    %732 = vperm.xlu0 %731, %v703
    %v733 = vpop.permute.xlu0 %732
    %736 = vset.pattern.permute.xlu0 0
    %737 = vperm.xlu0 %736, %v705
    %v738 = vpop.permute.xlu0 %737
    %741 = vset.pattern.permute.xlu0 0
    %742 = vperm.xlu0 %741, %v706
    %v743 = vpop.permute.xlu0 %742
    %746 = vset.pattern.permute.xlu0 0
    %747 = vperm.xlu0 %746, %v708
    %v748 = vpop.permute.xlu0 %747
    %751 = vset.pattern.permute.xlu0 0
    %752 = vperm.xlu0 %751, %v709
    %v753 = vpop.permute.xlu0 %752
    %756 = vset.pattern.permute.xlu0 0
    %757 = vperm.xlu0 %756, %v711
    %v758 = vpop.permute.xlu0 %757
    %761 = vset.pattern.permute.xlu0 0
    %762 = vperm.xlu0 %761, %v712
    %v763 = vpop.permute.xlu0 %762
    %766 = vset.pattern.permute.xlu0 0
    %767 = vperm.xlu0 %766, %v714
    %v768 = vpop.permute.xlu0 %767
    %771 = vset.pattern.permute.xlu0 0
    %772 = vperm.xlu0 %771, %v715
    %v773 = vpop.permute.xlu0 %772
    %776 = vset.pattern.permute.xlu0 0
    %777 = vperm.xlu0 %776, %v717
    %v778 = vpop.permute.xlu0 %777
    %781 = vset.pattern.permute.xlu0 0
    %782 = vperm.xlu0 %781, %v718
    %v783 = vpop.permute.xlu0 %782
    %786 = vset.pattern.permute.xlu0 0
    %787 = vperm.xlu0 %786, %v720
    %v788 = vpop.permute.xlu0 %787
    %791 = vset.pattern.permute.xlu0 0
    %792 = vperm.xlu0 %791, %v721
    %v793 = vpop.permute.xlu0 %792
    %796 = vset.pattern.permute.xlu0 0
    %797 = vperm.xlu0 %796, %v723
    %v798 = vpop.permute.xlu0 %797
    %801 = vset.pattern.permute.xlu0 0
    %802 = vperm.xlu0 %801, %v724
    %v803 = vpop.permute.xlu0 %802
    %v805 = vmul.f32 %v728, %v48
    %v806 = vmul.f32 %v733, %v49
    %v807 = vmul.f32 %v738, %v50
    %v808 = vmul.f32 %v743, %v51
    %v809 = vmul.f32 %v748, %v52
    %v810 = vmul.f32 %v753, %v53
    %v811 = vmul.f32 %v758, %v54
    %v812 = vmul.f32 %v763, %v55
    %v813 = vmul.f32 %v768, %v56
    %v814 = vmul.f32 %v773, %v57
    %v815 = vmul.f32 %v778, %v58
    %v816 = vmul.f32 %v783, %v59
    %v817 = vmul.f32 %v788, %v60
    %v818 = vmul.f32 %v793, %v61
    %v819 = vmul.f32 %v798, %v62
    %v820 = vmul.f32 %v803, %v63
    %v821 = vsel %vm264, %v805, 0.0
    %v822 = vsel %vm264, %v806, 0.0
    %v823 = vadd.f32 %v821, %v822
    %v824 = vrot.slane %v823, 4
    %v825 = vadd.f32 %v823, %v824
    %v826 = vrot.slane %v825, 2
    %v827 = vadd.f32 %v825, %v826
    %v828 = vrot.slane %v827, 1
    %v829 = vadd.f32 %v827, %v828
    %v830 = vsel %vm264, %v807, 0.0
    %v831 = vsel %vm264, %v808, 0.0
    %v832 = vadd.f32 %v830, %v831
    %v833 = vrot.slane %v832, 4
    %v834 = vadd.f32 %v832, %v833
    %v835 = vrot.slane %v834, 2
    %v836 = vadd.f32 %v834, %v835
    %v837 = vrot.slane %v836, 1
    %v838 = vadd.f32 %v836, %v837
    %v839 = vsel %vm264, %v809, 0.0
    %v840 = vsel %vm264, %v810, 0.0
    %v841 = vadd.f32 %v839, %v840
    %v842 = vrot.slane %v841, 4
    %v843 = vadd.f32 %v841, %v842
    %v844 = vrot.slane %v843, 2
    %v845 = vadd.f32 %v843, %v844
    %v846 = vrot.slane %v845, 1
    %v847 = vadd.f32 %v845, %v846
    %v848 = vsel %vm264, %v811, 0.0
    %v849 = vsel %vm264, %v812, 0.0
    %v850 = vadd.f32 %v848, %v849
    %v851 = vrot.slane %v850, 4
    %v852 = vadd.f32 %v850, %v851
    %v853 = vrot.slane %v852, 2
    %v854 = vadd.f32 %v852, %v853
    %v855 = vrot.slane %v854, 1
    %v856 = vadd.f32 %v854, %v855
    %v857 = vsel %vm264, %v813, 0.0
    %v858 = vsel %vm264, %v814, 0.0
    %v859 = vadd.f32 %v857, %v858
    %v860 = vrot.slane %v859, 4
    %v861 = vadd.f32 %v859, %v860
    %v862 = vrot.slane %v861, 2
    %v863 = vadd.f32 %v861, %v862
    %v864 = vrot.slane %v863, 1
    %v865 = vadd.f32 %v863, %v864
    %v866 = vsel %vm264, %v815, 0.0
    %v867 = vsel %vm264, %v816, 0.0
    %v868 = vadd.f32 %v866, %v867
    %v869 = vrot.slane %v868, 4
    %v870 = vadd.f32 %v868, %v869
    %v871 = vrot.slane %v870, 2
    %v872 = vadd.f32 %v870, %v871
    %v873 = vrot.slane %v872, 1
    %v874 = vadd.f32 %v872, %v873
    %v875 = vsel %vm264, %v817, 0.0
    %v876 = vsel %vm264, %v818, 0.0
    %v877 = vadd.f32 %v875, %v876
    %v878 = vrot.slane %v877, 4
    %v879 = vadd.f32 %v877, %v878
    %v880 = vrot.slane %v879, 2
    %v881 = vadd.f32 %v879, %v880
    %v882 = vrot.slane %v881, 1
    %v883 = vadd.f32 %v881, %v882
    %v884 = vsel %vm264, %v819, 0.0
    %v885 = vsel %vm264, %v820, 0.0
    %v886 = vadd.f32 %v884, %v885
    %v887 = vrot.slane %v886, 4
    %v888 = vadd.f32 %v886, %v887
    %v889 = vrot.slane %v888, 2
    %v890 = vadd.f32 %v888, %v889
    %v891 = vrot.slane %v890, 1
    %v892 = vadd.f32 %v890, %v891
    %v893 = vld [vmem:[#allocation2] sm:$0xff]
    %v894 = vld [vmem:[#allocation5] sm:$0xff]
    %v895 = vmul.f32 %v893, %v894
    %v904 = vsel %vm405, %v838, %v829
    %v905 = vsel %vm407, %v847, %v904
    %v906 = vsel %vm409, %v856, %v905
    %v907 = vsel %vm411, %v865, %v906
    %v908 = vsel %vm413, %v874, %v907
    %v909 = vsel %vm415, %v883, %v908
    %v910 = vsel %vm417, %v892, %v909
    %v912 = vmul.f32 %v895, %v910
    %v913 = vpack.c.bf16 %v912, %v912
    %vm914 = vcmask 257024
    %915 = vst.msk [vmem:[#allocation7] sm:$0xf] %vm914, %v913
    // Predicated region
    $region34: #{tpu_custom_call.1} parent=1 // pred_check
      _
    $region35: #{tpu_custom_call.1} parent=1 // pred_check_branch
      %917 = sbr.rel (0) target = $region37
    $region36: #{tpu_custom_call.1} parent=1 // pred_region
      %s919 = ssub.s32 64, 64
      %920 = vsyncadd [#allocation4], %s919
      %s922 = sshll.u32 [#allocation7], 4
      %s923 = int_to_ptr.vmem [resolvable:$true] %s922
      %925 = dma.vmem_to_hbm [thread:$0]  %s923, 64, %s6, [#allocation4]
    $region37: #{tpu_custom_call.1} parent=1 // pred_fallthru
      _
    // Predicated region
    $region38: #{tpu_custom_call.1} parent=1 // pred_check
      _
    $region39: #{tpu_custom_call.1} parent=1 // pred_check_branch
      %927 = sbr.rel (0) target = $region41
    $region40: #{tpu_custom_call.1} parent=1 // pred_region
      %928 = dma.done [#allocation4], 64
    $region41: #{tpu_custom_call.1} parent=1 // pred_fallthru
      _
    %929 = vsyncpa [#allocation3], 1
    %930 = vsyncpa [#allocation6], 1
    %931 = vsyncpa [#allocation4], 1

</llo_original>
